<compile_context>
chip_gen: v7x
topology: tpu7x:2x2x1
jax: 0.10.0
libtpu: 0.0.40
codegen_flags: <defaults>
</compile_context>

<pallas_src>
import functools
import math

import jax
import jax.numpy as jnp
from jax import lax
from jax.experimental import pallas as pl
from jax.experimental.pallas import tpu as pltpu

_MIB = 1024 * 1024


def _qn_qp(nbits):
    return float(-(2 ** (nbits - 1))), float(2 ** (nbits - 1) - 1)


def _step_scale(nbits):
    return 1.0 / math.sqrt(2.0 ** nbits - 1.0)


# ----------------------------------------------------------------------------
# Kernels
# ----------------------------------------------------------------------------
def _lsq_resident_kernel(x_ref, xq_ref, step_out_ref, slab_ref, acc_ref,
                         step_smem, *, nbits, total, rows, block_rows,
                         n_tiles):
    """VMEM-resident path, 2-phase grid (2, n_tiles).

    Phase 0: stream x tiles (BlockSpec-pipelined), stash them in a persistent
             VMEM slab and accumulate per-lane |x| partial sums.
    Phase 1: quantize straight out of the slab (no second HBM read of x).
    """
    Qn, Qp = _qn_qp(nbits)
    phase = pl.program_id(0)
    j = pl.program_id(1)

    @pl.when(phase == 0)
    def _reduce_and_stash():
        @pl.when(j == 0)
        def _init():
            acc_ref[...] = jnp.zeros_like(acc_ref)

        x_raw = x_ref[...]
        x = x_raw.astype(jnp.float32)
        # Mask rows past the true array end (stale VMEM in a partial tile).
        ridx = j * block_rows + lax.broadcasted_iota(jnp.int32, x.shape, 0)
        acc_ref[...] += jnp.sum(jnp.where(ridx < rows, jnp.abs(x), 0.0),
                                axis=0, keepdims=True)

        if n_tiles == 1:
            slab_ref[...] = x_raw
        else:
            off = pl.multiple_of(j * block_rows, 8)
            slab_ref[pl.ds(off, block_rows), :] = x_raw

        @pl.when(j == n_tiles - 1)
        def _finalize():
            mean_abs = jnp.sum(acc_ref[...]) * (1.0 / float(total))
            step = jnp.maximum(2.0 * mean_abs * _step_scale(nbits),
                               jnp.float32(1e-12))
            step_smem[0] = step
            step_out_ref[0] = step

    @pl.when(phase == 1)
    def _quantize():
        step = step_smem[0]
        inv_step = 1.0 / step              # exact scalar reciprocal, hoisted
        if n_tiles == 1:
            xs = slab_ref[...]
        else:
            off = pl.multiple_of(j * block_rows, 8)
            xs = slab_ref[pl.ds(off, block_rows), :]
        xs = xs.astype(jnp.float32)
        v_bar = jnp.clip(jnp.round(xs * inv_step), Qn, Qp)
        xq_ref[...] = (v_bar * step).astype(xq_ref.dtype)


def _abs_partial_sum_kernel(x_ref, psum_ref, acc_ref, *, rows, block_rows,
                            n_half):
    """Tiled pass 1: per-core partial |x| sums over a (2, n_half) grid.

    The leading size-2 axis is "parallel" so v7x runs the two halves on its two
    TensorCores; each half keeps a per-lane VMEM accumulator and writes its
    partial sums into its own (8, cols) row-block of the (16, cols) output.
    """
    c = pl.program_id(0)
    j = pl.program_id(1)

    @pl.when(j == 0)
    def _init():
        acc_ref[...] = jnp.zeros_like(acc_ref)

    # Unclamped global tile id: rows past the array end (partial last tile, or
    # core-1's overflow tile when the tile count is odd) mask to zero.
    t = c * n_half + j
    x = x_ref[...].astype(jnp.float32)
    ridx = t * block_rows + lax.broadcasted_iota(jnp.int32, x.shape, 0)
    acc_ref[...] += jnp.sum(jnp.where(ridx < rows, jnp.abs(x), 0.0),
                            axis=0, keepdims=True)

    @pl.when(j == n_half - 1)
    def _finalize():
        row = lax.broadcasted_iota(jnp.int32, psum_ref.shape, 0)
        psum_ref[...] = jnp.where(row == 0, acc_ref[...], 0.0)


def _quantize_kernel(step_ref, x_ref, xq_ref, *, nbits):
    """Tiled pass 2: elementwise LSQ quantize, step broadcast from SMEM."""
    Qn, Qp = _qn_qp(nbits)
    step = step_ref[0]
    inv_step = 1.0 / step                  # exact scalar reciprocal, hoisted
    x = x_ref[...].astype(jnp.float32)
    v_bar = jnp.clip(jnp.round(x * inv_step), Qn, Qp)
    xq_ref[...] = (v_bar * step).astype(xq_ref.dtype)


# ----------------------------------------------------------------------------
# Wrapper
# ----------------------------------------------------------------------------
def _vmem_capacity_bytes():
    try:
        info = pltpu.get_tpu_info()
        cap = getattr(info, "vmem_capacity_bytes", None)
        if cap:
            return int(cap)
    except Exception:
        pass
    return 64 * _MIB  # conservative default (v7x per-core VMEM)


def _to_2d(flat, total):
    """Free reshape to a lane-dense 2-D view; tiny pad only if 128 does not
    divide total (rare for NN activations)."""
    for cols in (512, 256, 128):
        if total % cols == 0:
            return flat.reshape(total // cols, cols), cols, False
    cols = 128
    pad = (-total) % cols
    # Fallback: costs one extra read+write of x (pad) and of x_q (trim).
    return (jnp.pad(flat, (0, pad)).reshape((total + pad) // cols, cols),
            cols, True)


def _pick_block_rows(default_rows, rows):
    default_rows = max(8, (int(default_rows) // 8) * 8)
    # Single full-extent block when the whole array fits in one tile.
    return rows if rows <= default_rows else default_rows


def partial_sum_lsq(x, nbits=3, *, force_path=None, resident_block_rows=1024,
                    p1_block_rows=4096, p2_block_rows=2048):
    """JAX/Pallas equivalent of PartialSumLSQ.forward on a fresh module.

    Returns (x_q, step_size): x_q has x's shape/dtype, step_size is f32 (1,).
    force_path: None (auto) | "resident" | "tiled"  (mainly for testing).
    Block-row knobs refer to rows of the internal (rows, cols) view and are
    scaled so tile *bytes* stay constant across cols in {512, 256, 128}.
    """
    orig_shape = x.shape
    total = int(x.size)
    itemsize = int(x.dtype.itemsize)
    flat = x.reshape(-1)
    x2, cols, padded = _to_2d(flat, total)
    rows = int(x2.shape[0])
    col_scale = max(1, 512 // cols)

    vmem_cap = _vmem_capacity_bytes()
    vmem_limit = int(min((vmem_cap * 3) // 4, vmem_cap - 16 * _MIB, 96 * _MIB))

    # ---------------- resident (single-kernel, 2 HBM passes) path ----------
    br_res = _pick_block_rows(resident_block_rows * col_scale, rows)
    n_tiles_res = pl.cdiv(rows, br_res)
    slab_bytes = n_tiles_res * br_res * cols * itemsize
    tile_bytes = br_res * cols * itemsize
    resident_need = slab_bytes + 4 * tile_bytes + 2 * _MIB
    use_resident = resident_need <= vmem_limit - 8 * _MIB
    if force_path == "resident":
        use_resident = True
    elif force_path == "tiled":
        use_resident = False

    if use_resident:
        kernel = functools.partial(
            _lsq_resident_kernel, nbits=nbits, total=total, rows=rows,
            block_rows=br_res, n_tiles=n_tiles_res)
        xq2, step = pl.pallas_call(
            kernel,
            out_shape=(jax.ShapeDtypeStruct((rows, cols), x.dtype),
                       jax.ShapeDtypeStruct((1,), jnp.float32)),
            grid_spec=pltpu.PrefetchScalarGridSpec(
                num_scalar_prefetch=0,
                grid=(2, n_tiles_res),
                in_specs=[pl.BlockSpec((br_res, cols),
                                       lambda p, j: ((1 - p) * j, 0))],
                out_specs=(
                    pl.BlockSpec((br_res, cols), lambda p, j: (p * j, 0)),
                    pl.BlockSpec(memory_space=pltpu.SMEM),
                ),
                scratch_shapes=[
                    pltpu.VMEM((n_tiles_res * br_res, cols), x.dtype),
                    pltpu.VMEM((1, cols), jnp.float32),
                    pltpu.SMEM((1,), jnp.float32),
                ]),
            compiler_params=pltpu.CompilerParams(
                dimension_semantics=("arbitrary", "arbitrary"),
                vmem_limit_bytes=vmem_limit),
            cost_estimate=pl.CostEstimate(
                flops=7 * total, transcendentals=0,
                bytes_accessed=2 * total * itemsize + 4),
        )(x2)
    else:
        # ---------------- tiled two-pass path ------------------------------
        # Pass 1: per-core |x| partial sums -> step computed in the wrapper.
        br1 = _pick_block_rows(p1_block_rows * col_scale, rows)
        n_tiles1 = pl.cdiv(rows, br1)
        n_half = pl.cdiv(n_tiles1, 2)
        k1 = functools.partial(_abs_partial_sum_kernel, rows=rows,
                               block_rows=br1, n_half=n_half)

        def _x1_map(c, j):
            # Clamp so core 1's overflow step (odd tile count) never DMAs OOB;
            # its contribution is masked to zero in-kernel.
            return (jnp.minimum(c * n_half + j, n_tiles1 - 1), 0)

        psums = pl.pallas_call(
            k1,
            out_shape=jax.ShapeDtypeStruct((16, cols), jnp.float32),
            grid_spec=pltpu.PrefetchScalarGridSpec(
                num_scalar_prefetch=0,
                grid=(2, n_half),
                in_specs=[pl.BlockSpec((br1, cols), _x1_map)],
                out_specs=pl.BlockSpec((8, cols), lambda c, j: (c, 0)),
                scratch_shapes=[pltpu.VMEM((1, cols), jnp.float32)]),
            compiler_params=pltpu.CompilerParams(
                dimension_semantics=("parallel", "arbitrary"),
                vmem_limit_bytes=vmem_limit),
            cost_estimate=pl.CostEstimate(
                flops=2 * total, transcendentals=0,
                bytes_accessed=total * itemsize + 16 * cols * 4),
        )(x2)

        mean_abs = jnp.sum(psums) * (1.0 / float(total))
        step = 2.0 * mean_abs * _step_scale(nbits)
        step = jnp.maximum(step, 1e-12).astype(jnp.float32).reshape((1,))

        # Pass 2: grid-tiled elementwise quantize ("parallel" -> both TCs).
        br2 = _pick_block_rows(p2_block_rows * col_scale, rows)
        n_tiles2 = pl.cdiv(rows, br2)
        k2 = functools.partial(_quantize_kernel, nbits=nbits)
        xq2 = pl.pallas_call(
            k2,
            out_shape=jax.ShapeDtypeStruct((rows, cols), x.dtype),
            grid_spec=pltpu.PrefetchScalarGridSpec(
                num_scalar_prefetch=0,
                grid=(n_tiles2,),
                in_specs=[
                    pl.BlockSpec(memory_space=pltpu.SMEM),                 # step
                    pl.BlockSpec((br2, cols), lambda i: (i, 0)),           # x
                ],
                out_specs=pl.BlockSpec((br2, cols), lambda i: (i, 0))),
            compiler_params=pltpu.CompilerParams(
                dimension_semantics=("parallel",),
                vmem_limit_bytes=vmem_limit),
            cost_estimate=pl.CostEstimate(
                flops=5 * total, transcendentals=0,
                bytes_accessed=2 * total * itemsize + 4),
        )(step, x2)

    xq_flat = xq2.reshape(-1)
    if padded:
        xq_flat = xq_flat[:total]
    return xq_flat.reshape(orig_shape), step


# ----------------------------------------------------------------------------
# Reference + checks
# ----------------------------------------------------------------------------
def _reference(x, nbits=3):
    """Pure-JAX reference (faithful divide formulation of the PyTorch module)."""
    Qn, Qp = _qn_qp(nbits)
    xf = x.astype(jnp.float32)
    step = 2.0 * jnp.mean(jnp.abs(xf)) / math.sqrt(2.0 ** nbits - 1.0)
    v_bar = jnp.clip(jnp.round(xf / step), Qn, Qp)
    return (v_bar * step).astype(x.dtype), step.astype(jnp.float32).reshape(1)


def _check(tag, x, x_q, step, nbits=3):
    x_q_ref, step_ref_val = _reference(x, nbits=nbits)
    assert x_q.shape == x.shape and x_q.dtype == x.dtype, tag
    assert jnp.allclose(step, step_ref_val, rtol=1e-5, atol=1e-7), \
        (tag, float(step[0]), float(step_ref_val[0]))
    diff = jnp.abs(x_q.astype(jnp.float32) - x_q_ref.astype(jnp.float32))
    bad = diff > 1e-5
    n_bad = int(jnp.sum(bad))
    # Reduction-order / reciprocal-hoist differences may flip a razor-thin
    # round-to-nearest tie by exactly one quantization step on a handful of
    # elements; anything else is a real error.
    assert n_bad <= 8, f"{tag}: {n_bad} mismatching elements"
    if n_bad:
        q = float(step_ref_val[0])
        max_tie_err = float(jnp.max(jnp.where(bad, jnp.abs(diff - q), 0.0)))
        assert max_tie_err < 1e-4, f"{tag}: non-tie mismatch ({max_tie_err})"


if __name__ == "__main__":
    key = jax.random.PRNGKey(0)
    k1, k2, k3, k4 = jax.random.split(key, 4)

    # 1) NCHW activation matching the PyTorch convention
    #    (auto dispatch -> VMEM-resident single-kernel path).
    x1 = jax.random.normal(k1, (2, 4, 16, 16), dtype=jnp.float32)
    xq1, step1 = partial_sum_lsq(x1, nbits=3)
    jax.block_until_ready((xq1, step1))
    _check("resident-auto", x1, xq1, step1)

    # 2) Resident path with several pipelined tiles and a ragged last tile
    #    (rows=30, block_rows=8 -> partial tile masked in the reduction).
    x2 = jax.random.normal(k2, (2, 8, 30, 32), dtype=jnp.float32)
    xq2, step2 = partial_sum_lsq(x2, nbits=3, force_path="resident",
                                 resident_block_rows=8)
    jax.block_until_ready((xq2, step2))
    _check("resident-multitile", x2, xq2, step2)

    # 3) Tiled two-pass path: two-core-split reduction with an odd tile count
    #    and partial tail tiles in both passes (no pad, no trim).
    x3 = jax.random.normal(k3, (2, 8, 30, 20), dtype=jnp.float32)
    xq3, step3 = partial_sum_lsq(x3, nbits=3, force_path="tiled",
                                 p1_block_rows=8, p2_block_rows=16)
    jax.block_until_ready((xq3, step3))
    _check("tiled", x3, xq3, step3)

    # 4) Total not divisible by 128 -> rare pad+trim fallback path.
    x4 = jax.random.normal(k4, (3, 5, 7, 11), dtype=jnp.float32)
    xq4, step4 = partial_sum_lsq(x4, nbits=3)
    jax.block_until_ready((xq4, step4))
    _check("ragged-fallback", x4, xq4, step4)

    print("KERNEL_OK")
</pallas_src>

<mosaic_0001>
module attributes {stable_mosaic.version = 11 : i64} {
  func.func @_lsq_resident_kernel(%arg0: i32, %arg1: i32, %arg2: memref<4x512xf32, #tpu.memory_space<vmem>>, %arg3: memref<4x512xf32, #tpu.memory_space<vmem>>, %arg4: memref<1xf32, #tpu.memory_space<smem>>, %arg5: memref<4x512xf32, #tpu.memory_space<vmem>>, %arg6: memref<1x512xf32, #tpu.memory_space<vmem>>, %arg7: memref<1xf32, #tpu.memory_space<smem>>) attributes {dimension_semantics = [#tpu.dimension_semantics<arbitrary>, #tpu.dimension_semantics<arbitrary>], iteration_bounds = array<i64: 2, 1>, scalar_prefetch = 0 : i64, scratch_operands = 3 : i64, tpu.core_type = #tpu.core_type<tc>, window_params = [{transform_indices = @transform_0, window_bounds = array<i64: 4, 512>}, {transform_indices = @transform_1, window_bounds = array<i64: 4, 512>}, {transform_indices = @transform_2, window_bounds = array<i64: 1>}]} {
    %c0_i32 = arith.constant 0 : i32
    %0 = arith.cmpi eq, %arg0, %c0_i32 : i32
    %1 = arith.extui %0 : i1 to i32
    %c0_i32_0 = arith.constant 0 : i32
    %2 = arith.cmpi ne, %1, %c0_i32_0 : i32
    scf.if %2 {
      %c0_i32_2 = arith.constant 0 : i32
      %6 = arith.cmpi eq, %arg1, %c0_i32_2 : i32
      %7 = arith.extui %6 : i1 to i32
      %c0_i32_3 = arith.constant 0 : i32
      %8 = arith.cmpi ne, %7, %c0_i32_3 : i32
      scf.if %8 {
        %cst_15 = arith.constant 0.000000e+00 : f32
        %28 = vector.broadcast %cst_15 : f32 to vector<1x512xf32>
        %c0_16 = arith.constant 0 : index
        %c0_17 = arith.constant 0 : index
        %29 = vector.load %arg6[%c0_16, %c0_17] : memref<1x512xf32, #tpu.memory_space<vmem>>, vector<1x512xf32>
        tpu.vector_store %arg6[%c0_16, %c0_17], %28 {strides = array<i32>} : memref<1x512xf32, #tpu.memory_space<vmem>>, vector<1x512xf32>,
      } else {
      }
      %c0 = arith.constant 0 : index
      %c0_4 = arith.constant 0 : index
      %9 = vector.load %arg2[%c0, %c0_4] : memref<4x512xf32, #tpu.memory_space<vmem>>, vector<4x512xf32>
      %c4_i32 = arith.constant 4 : i32
      %10 = arith.muli %arg1, %c4_i32 : i32
      %11 = tpu.iota {dimensions = array<i32: 0>} : vector<4x512xi32>
      %12 = vector.broadcast %10 : i32 to vector<4x512xi32>
      %13 = arith.addi %12, %11 : vector<4x512xi32>
      %c0_5 = arith.constant 0 : index
      %c0_6 = arith.constant 0 : index
      %14 = vector.load %arg6[%c0_5, %c0_6] : memref<1x512xf32, #tpu.memory_space<vmem>>, vector<1x512xf32>
      %c4_i32_7 = arith.constant 4 : i32
      %15 = vector.broadcast %c4_i32_7 : i32 to vector<4x512xi32>
      %16 = arith.cmpi slt, %13, %15 : vector<4x512xi32>
      %17 = math.absf %9 : vector<4x512xf32>
      %cst = arith.constant 0.000000e+00 : f32
      %18 = vector.broadcast %cst : f32 to vector<4x512xf32>
      %19 = arith.select %16, %17, %18 : vector<4x512xi1>, vector<4x512xf32>
      %cst_8 = arith.constant dense<0.000000e+00> : vector<512xf32>
      %20 = vector.multi_reduction <add>, %19, %cst_8 [0] : vector<4x512xf32> to vector<512xf32>
      %21 = vector.shape_cast %20 : vector<512xf32> to vector<1x512xf32>
      %22 = arith.addf %14, %21 : vector<1x512xf32>
      %c0_9 = arith.constant 0 : index
      %c0_10 = arith.constant 0 : index
      %23 = vector.load %arg6[%c0_9, %c0_10] : memref<1x512xf32, #tpu.memory_space<vmem>>, vector<1x512xf32>
      tpu.vector_store %arg6[%c0_9, %c0_10], %22 {strides = array<i32>} : memref<1x512xf32, #tpu.memory_space<vmem>>, vector<1x512xf32>,
      %c0_11 = arith.constant 0 : index
      %c0_12 = arith.constant 0 : index
      %24 = vector.load %arg5[%c0_11, %c0_12] : memref<4x512xf32, #tpu.memory_space<vmem>>, vector<4x512xf32>
      tpu.vector_store %arg5[%c0_11, %c0_12], %9 {strides = array<i32>} : memref<4x512xf32, #tpu.memory_space<vmem>>, vector<4x512xf32>,
      %c0_i32_13 = arith.constant 0 : i32
      %25 = arith.cmpi eq, %arg1, %c0_i32_13 : i32
      %26 = arith.extui %25 : i1 to i32
      %c0_i32_14 = arith.constant 0 : i32
      %27 = arith.cmpi ne, %26, %c0_i32_14 : i32
      scf.if %27 {
        %c0_15 = arith.constant 0 : index
        %c0_16 = arith.constant 0 : index
        %28 = vector.load %arg6[%c0_15, %c0_16] : memref<1x512xf32, #tpu.memory_space<vmem>>, vector<1x512xf32>
        %29 = vector.shape_cast %28 : vector<1x512xf32> to vector<1x1x512xf32>
        %cst_17 = arith.constant dense<0.000000e+00> : vector<1xf32>
        %30 = vector.multi_reduction <add>, %29, %cst_17 [1, 2] : vector<1x1x512xf32> to vector<1xf32>
        %31 = vector.shape_cast %30 : vector<1xf32> to vector<1x1x1xf32>
        %32 = vector.extract %31[0, 0, 0] : f32 from vector<1x1x1xf32>
        %cst_18 = arith.constant 4.8828125E-4 : f32
        %33 = arith.mulf %32, %cst_18 : f32
        %cst_19 = arith.constant 2.000000e+00 : f32
        %34 = arith.mulf %cst_19, %33 : f32
        %cst_20 = arith.constant 0.377964467 : f32
        %35 = arith.mulf %34, %cst_20 : f32
        %cst_21 = arith.constant 9.99999996E-13 : f32
        %36 = arith.maximumf %35, %cst_21 : f32
        %c0_22 = arith.constant 0 : index
        %37 = memref.load %arg7[%c0_22] : memref<1xf32, #tpu.memory_space<smem>>
        memref.store %36, %arg7[%c0_22] : memref<1xf32, #tpu.memory_space<smem>>
        %c0_23 = arith.constant 0 : index
        %38 = memref.load %arg4[%c0_23] : memref<1xf32, #tpu.memory_space<smem>>
        memref.store %36, %arg4[%c0_23] : memref<1xf32, #tpu.memory_space<smem>>
      } else {
      }
    } else {
    }
    %c1_i32 = arith.constant 1 : i32
    %3 = arith.cmpi eq, %arg0, %c1_i32 : i32
    %4 = arith.extui %3 : i1 to i32
    %c0_i32_1 = arith.constant 0 : i32
    %5 = arith.cmpi ne, %4, %c0_i32_1 : i32
    scf.if %5 {
      %c0 = arith.constant 0 : index
      %6 = memref.load %arg7[%c0] : memref<1xf32, #tpu.memory_space<smem>>
      %cst = arith.constant 1.000000e+00 : f32
      %7 = arith.divf %cst, %6 : f32
      %c0_2 = arith.constant 0 : index
      %c0_3 = arith.constant 0 : index
      %8 = vector.load %arg5[%c0_2, %c0_3] : memref<4x512xf32, #tpu.memory_space<vmem>>, vector<4x512xf32>
      %9 = vector.broadcast %7 : f32 to vector<4x512xf32>
      %10 = arith.mulf %8, %9 : vector<4x512xf32>
      %11 = math.roundeven %10 : vector<4x512xf32>
      %cst_4 = arith.constant -4.000000e+00 : f32
      %cst_5 = arith.constant 3.000000e+00 : f32
      %12 = vector.broadcast %cst_4 : f32 to vector<4x512xf32>
      %13 = arith.maximumf %12, %11 : vector<4x512xf32>
      %14 = vector.broadcast %cst_5 : f32 to vector<4x512xf32>
      %15 = arith.minimumf %14, %13 : vector<4x512xf32>
      %16 = vector.broadcast %6 : f32 to vector<4x512xf32>
      %17 = arith.mulf %15, %16 : vector<4x512xf32>
      %c0_6 = arith.constant 0 : index
      %c0_7 = arith.constant 0 : index
      %18 = vector.load %arg3[%c0_6, %c0_7] : memref<4x512xf32, #tpu.memory_space<vmem>>, vector<4x512xf32>
      tpu.vector_store %arg3[%c0_6, %c0_7], %17 {strides = array<i32>} : memref<4x512xf32, #tpu.memory_space<vmem>>, vector<4x512xf32>,
    } else {
    }
    return
  }
  func.func @transform_0(%arg0: i32, %arg1: i32) -> (i32, i32) {
    %c1_i32 = arith.constant 1 : i32
    %0 = arith.subi %c1_i32, %arg0 : i32
    %1 = arith.muli %0, %arg1 : i32
    %c0_i32 = arith.constant 0 : i32
    %c0_i32_0 = arith.constant 0 : i32
    return %1, %c0_i32 : i32, i32
  }
  func.func @transform_1(%arg0: i32, %arg1: i32) -> (i32, i32) {
    %0 = arith.muli %arg0, %arg1 : i32
    %c0_i32 = arith.constant 0 : i32
    %c0_i32_0 = arith.constant 0 : i32
    return %0, %c0_i32 : i32, i32
  }
  func.func @transform_2(%arg0: i32, %arg1: i32) -> i32 {
    %c0_i32 = arith.constant 0 : i32
    %c0_i32_0 = arith.constant 0 : i32
    return %c0_i32 : i32
  }
}

</mosaic_0001>

<llo_original>
// kernel: tpu_custom_call.1
$region0: #{tpu_custom_call.1}
  #allocation0 [shape = 'u32[]', space=smem, size = 0x4, offset = 0x4, fixed_abs, tag = 'smem constant byte address 0x4 - core index']
  #allocation1 [shape = 'u32[144,128]{1,0:T(1,128)}', space=vmem, size = 0x12000, scoped, tag = 'internal scratch']
  #allocation2 [shape = 'f32[4,512]{1,0:T(4,128)}', space=vmem, size = 0x2000, scoped, tag = 'scratch operand']
  #allocation3 [shape = 'f32[1,512]{1,0:T(1,128)}', space=vmem, size = 0x800, scoped, tag = 'scratch operand']
  #allocation4 [shape = 'f32[1]{0:T(128)}', space=smem, size = 0x200, scoped, tag = 'scratch operand']
  %s0 = inlined_call_operand.hbm [shape: f32[4,512], index: 0, kind: input, shape index: {}]
  %s1 = inlined_call_operand.hbm [shape: f32[4,512], index: 1, kind: output, shape index: {0}]
  %s2 = inlined_call_operand.hbm [shape: f32[1], index: 2, kind: output, shape index: {1}]
  %3 = xla_tuple %s1, %s2
  %s4 = sld [smem:[#allocation0]]
  $region65: #{tpu_custom_call.1} parent=0
    _
  %s6 = ssub.s32 1, %s4
  %s7 = scalar_select 0, %s6, %s4
  $region1: #{tpu_custom_call.1} parent=0
    #allocation5 [shape = 'u8[16384]{0}', space=vmem, size = 0x4000, scoped, tag = 'input window, operand 0']
    #allocation6 [shape = 's32[2]{0}', space=sflag, size = 0x8, scoped, tag = 'scoped memory for tpu_custom_call.1']
    #allocation7 [shape = 's32[2]{0}', space=sflag, size = 0x8, scoped, tag = 'scoped memory for tpu_custom_call.1']
    #allocation8 [shape = 's32[2]{0}', space=sflag, size = 0x8, scoped, tag = 'scoped memory for tpu_custom_call.1']
    #allocation9 [shape = 'u8[16384]{0}', space=vmem, size = 0x4000, scoped, tag = 'output window, operand 0']
    #allocation10 [shape = 'u8[512]{0}', space=smem, size = 0x200, scoped, tag = 'output window, operand 1, single buffered']
    %8 = vsyncpa [#allocation6], 0
    %s9 = scalar_lea.sflag [#allocation6], 1
    %10 = vsyncpa %s9, 0
    %11 = vsyncpa [#allocation7], 0
    %s12 = scalar_lea.sflag [#allocation7], 1
    %13 = vsyncpa %s12, 0
    %14 = vsyncpa [#allocation8], 0
    loop: start=0, step=1, limit=4
    $region2: #{tpu_custom_call.1} parent=1 // loop_pre_header
      _
    $region3: #{tpu_custom_call.1} parent=1 // loop_header
      %s16 = sphi 0, %s20
      %p17 = scmp.ge.s32.totalorder %s16, 4
      %s23 = sphi 0, %s35
      %s24 = sphi 0, %s31
      %s25 = sphi 0, %s23
      %s26 = sphi 0, %s24
      %s27 = sphi 0, %s25
      %s28 = sphi 0, %s26
      %s42 = sphi 0, %s44
      %s45 = sphi 0, %s42
      %s46 = sphi 0, %s45
      %s62 = sphi 0, %s46
      %s70 = sphi 0, %s72
      %s73 = sphi 0, %s70
      %s74 = sphi 0, %s73
      %s90 = sphi 0, %s74
      %s94 = sphi 0, %s94
      %s96 = sphi 0, %s94
      %s97 = sphi 0, %s96
      %s111 = sphi 0, %s97
    $region4: #{tpu_custom_call.1} parent=1 // loop_header_branch
      %19 = sbr.rel (%p17) target = $region8
    $region5: #{tpu_custom_call.1} parent=1 // loop_body
      %s21 = ssub.s32 %s16, 1
      %s22 = ssub.s32 %s16, 2
      %s29 = sadd.s32 1, %s24
      %p30 = scmp.ge.s32.totalorder %s29, 1
      %s31 = scalar_select %p30, 0, %s29
      %s32 = sadd.s32 1, %s23
      %s33 = scalar_select %p30, %s32, %s23
      %p34 = scmp.ge.s32.totalorder %s33, 2
      %s35 = scalar_select %p34, 0, %s33
      %s36 = ssub.s32 1, %s23
      %s37 = smul.u32 %s36, %s24
      %s38 = ssub.s32 1, %s35
      %s39 = smul.u32 %s38, %s31
      %s40 = ssub.s32 %s37, %s39
      %p41 = scmp.eq.s32.totalorder %s40, 0
      %s43 = sadd.s32 %s42, 1
      %s44 = scalar_select %p41, %s42, %s43
      %p47 = pneg %p41
      %p48 = scmp.eq.s32.totalorder %s16, 1
      %p49 = por %p47, %p48
      %p50 = scmp.ne.s32.totalorder %s42, %s45
      %p51 = scmp.eq.s32.totalorder %s16, 0
      %p52 = por %p50, %p51
      %p53 = scmp.ne.s32.totalorder %s42, %s45
      %p54 = scmp.eq.s32.totalorder %s21, 1
      %p55 = por %p53, %p54
      %p56 = scmp.ne.s32.totalorder %s45, %s46
      %p57 = scmp.eq.s32.totalorder %s21, 0
      %p58 = por %p56, %p57
      %p59 = scmp.ne.s32.totalorder %s45, %s46
      %p60 = scmp.eq.s32.totalorder %s22, 1
      %p61 = por %p59, %p60
      %p63 = scmp.ne.s32.totalorder %s46, %s62
      %p64 = scmp.eq.s32.totalorder %s22, 0
      %p65 = por %p63, %p64
      %s66 = smul.u32 %s23, %s24
      %s67 = smul.u32 %s35, %s31
      %s68 = ssub.s32 %s66, %s67
      %p69 = scmp.eq.s32.totalorder %s68, 0
      %s71 = sadd.s32 %s70, 1
      %s72 = scalar_select %p69, %s70, %s71
      %p75 = pneg %p69
      %p76 = scmp.eq.s32.totalorder %s16, 1
      %p77 = por %p75, %p76
      %p78 = scmp.ne.s32.totalorder %s70, %s73
      %p79 = scmp.eq.s32.totalorder %s16, 0
      %p80 = por %p78, %p79
      %p81 = scmp.ne.s32.totalorder %s70, %s73
      %p82 = scmp.eq.s32.totalorder %s21, 1
      %p83 = por %p81, %p82
      %p84 = scmp.ne.s32.totalorder %s73, %s74
      %p85 = scmp.eq.s32.totalorder %s21, 0
      %p86 = por %p84, %p85
      %p87 = scmp.ne.s32.totalorder %s73, %s74
      %p88 = scmp.eq.s32.totalorder %s22, 1
      %p89 = por %p87, %p88
      %p91 = scmp.ne.s32.totalorder %s74, %s90
      %p92 = scmp.eq.s32.totalorder %s22, 0
      %p93 = por %p91, %p92
      %s95 = sadd.s32 %s94, 1
      %p98 = scmp.eq.s32.totalorder %s16, 1
      %p99 = scmp.ne.s32.totalorder %s94, %s96
      %p100 = scmp.eq.s32.totalorder %s16, 0
      %p101 = por %p99, %p100
      %p102 = scmp.ne.s32.totalorder %s94, %s96
      %p103 = scmp.eq.s32.totalorder %s21, 1
      %p104 = por %p102, %p103
      %p105 = scmp.ne.s32.totalorder %s96, %s97
      %p106 = scmp.eq.s32.totalorder %s21, 0
      %p107 = por %p105, %p106
      %p108 = scmp.ne.s32.totalorder %s96, %s97
      %p109 = scmp.eq.s32.totalorder %s22, 1
      %p110 = por %p108, %p109
      %p112 = scmp.ne.s32.totalorder %s97, %s111
      %p113 = scmp.eq.s32.totalorder %s22, 0
      %p114 = por %p112, %p113
      %p115 = scmp.le.s32.totalorder 1, %s16
      %p116 = scmp.lt.s32.totalorder %s16, 3
      %p117 = pnand %p115, %p116
      %p118 = pneg %p117
      // Predicated region
      $region9: #{tpu_custom_call.1} parent=5 // pred_check
        _
      $region10: #{tpu_custom_call.1} parent=5 // pred_check_branch
        %120 = sbr.rel (%p117) target = $region12
      $region11: #{tpu_custom_call.1} parent=5 // pred_region
        %s121 = ssub.s32 %s16, 1
      $region12: #{tpu_custom_call.1} parent=5 // pred_fallthru
        _
      %p122 = scmp.lt.s32.totalorder %s16, 2
      // Predicated region
      $region13: #{tpu_custom_call.1} parent=5 // pred_check
        %p123 = pneg %p122
      $region14: #{tpu_custom_call.1} parent=5 // pred_check_branch
        %125 = sbr.rel (%p123) target = $region16
      $region15: #{tpu_custom_call.1} parent=5 // pred_region
        // Predicated region
        $region17: #{tpu_custom_call.1} parent=15 // pred_check
          %p126 = pneg %p52
        $region18: #{tpu_custom_call.1} parent=15 // pred_check_branch
          %128 = sbr.rel (%p126) target = $region20
        $region19: #{tpu_custom_call.1} parent=15 // pred_region
          %s129 = sand.u32 %s42, 1
          %s130 = scalar_lea.sflag [#allocation6], %s129
          %s131 = sand.u32 %s42, 1
          %s132 = smul.addr %s131, 16
          %s133 = scalar_lea.vmem [#allocation5], %s132
          %s134 = ssub.s32 1, %s23
          %s135 = smul.u32 %s134, %s24
          %s137 = ssub.s32 256, 256
          %138 = vsyncadd %s130, %s137
          %s139 = smul.addr %s135, 4
          %s140 = smul.addr %s139, 64
          %s141 = scalar_lea.hbm %s0, %s140
          %s143 = sshll.u32 %s133, 4
          %s144 = int_to_ptr.vmem [resolvable:$true] %s143
          %146 = dma.hbm_to_vmem [thread:$0]  %s141, 256, %s144, %s130
        $region20: #{tpu_custom_call.1} parent=15 // pred_fallthru
          _
      $region16: #{tpu_custom_call.1} parent=5 // pred_fallthru
        _
      %p147 = scmp.le.s32.totalorder 1, %s16
      %p148 = scmp.lt.s32.totalorder %s16, 3
      %p149 = pnand %p147, %p148
      %p150 = pneg %p149
      // Predicated region
      $region21: #{tpu_custom_call.1} parent=5 // pred_check
        _
      $region22: #{tpu_custom_call.1} parent=5 // pred_check_branch
        %152 = sbr.rel (%p149) target = $region24
      $region23: #{tpu_custom_call.1} parent=5 // pred_region
        %s153 = ssub.s32 %s16, 1
        %s154 = sand.u32 %s45, 1
        %s155 = scalar_lea.sflag [#allocation6], %s154
        %s156 = sand.u32 %s45, 1
        %s157 = smul.addr %s156, 16
        %s158 = scalar_lea.vmem [#allocation5], %s157
        // Predicated region
        $region25: #{tpu_custom_call.1} parent=23 // pred_check
          %p159 = pneg %p58
        $region26: #{tpu_custom_call.1} parent=23 // pred_check_branch
          %161 = sbr.rel (%p159) target = $region28
        $region27: #{tpu_custom_call.1} parent=23 // pred_region
          %162 = dma.done %s155, 256
        $region28: #{tpu_custom_call.1} parent=23 // pred_fallthru
          _
        %s163 = sand.u32 %s45, 1
        %s164 = scalar_lea.sflag [#allocation6], %s163
        %s165 = sand.u32 %s45, 1
        %s166 = smul.addr %s165, 16
        %s167 = scalar_lea.vmem [#allocation5], %s166
        %p168 = pneg %p58
        %p169 = pneg %p55
        %p170 = pneg %p86
        %p171 = pneg %p83
        %s172 = sand.u32 %s73, 1
        %s173 = scalar_lea.sflag [#allocation7], %s172
        %s174 = sand.u32 %s73, 1
        %s175 = smul.addr %s174, 16
        %s176 = scalar_lea.vmem [#allocation9], %s175
        %p177 = pneg %p107
        %p178 = pneg %p104
        %s179 = ssub.s32 1, %s25
        %s180 = smul.u32 %s179, %s26
        %s181 = smul.u32 %s25, %s26
        %p182 = scmp.eq.s32.totalorder %s25, 0
        // Predicated region
        $region29: #{tpu_custom_call.1} parent=23 // pred_check
          %p183 = pneg %p182
        $region30: #{tpu_custom_call.1} parent=23 // pred_check_branch
          %185 = sbr.rel (%p183) target = $region32
        $region31: #{tpu_custom_call.1} parent=23 // pred_region
          %p186 = scmp.eq.s32.totalorder %s26, 0
          // Predicated region
          $region33: #{tpu_custom_call.1} parent=31 // pred_check
            %p187 = pneg %p186
          $region34: #{tpu_custom_call.1} parent=31 // pred_check_branch
            %189 = sbr.rel (%p187) target = $region36
          $region35: #{tpu_custom_call.1} parent=31 // pred_region
            %v190 = vlaneseq
            %vm191 = vcmp.ge.s32.totalorder %v190, 0
            %vm192 = vcmp.lt.s32.totalorder %v190, 512
            %vm193 = vmand %vm191, %vm192
            %194 = vst.msk [vmem:[#allocation3] sm:$0xf] %vm193, 0.0
          $region36: #{tpu_custom_call.1} parent=31 // pred_fallthru
            _
          %v195 = vld [vmem:[%s158] sm:$0xff]
          %v196 = vld [vmem:[%s158 + $0x8] sm:$0xff]
          %s197 = smul.u32 %s26, 4
          %v198 = vlaneseq
          %v199 = vshrl.u32 %v198, 7
          %v200 = vstv %s197
          %v201 = vadd.s32 %v200, %v199
          %v202 = vld [vmem:[#allocation3] sm:$0xf]
          %vm203 = vcmp.lt.s32.totalorder %v201, 4
          %v204 = vand.u32 2147483647, %v195
          %v205 = vand.u32 2147483647, %v196
          %v208 = vcombine.high %v204, %v204
          %v209 = vcombine.high %v205, %v205
          %v212 = vsel %vm203, %v204, 0.0
          %v213 = vsel %vm203, %v208, 0.0
          %v214 = vsel %vm203, %v205, 0.0
          %v215 = vsel %vm203, %v209, 0.0
          %vm216 = vcmask 1043456
          %v217 = vsel %vm216, %v212, 0.0
          %v218 = vrot.slane %v217, 4
          %v219 = vadd.f32 %v217, %v218
          %v220 = vrot.slane %v219, 2
          %v221 = vadd.f32 %v219, %v220
          %v222 = vrot.slane %v221, 1
          %v223 = vadd.f32 %v221, %v222
          %v224 = vsel %vm216, %v213, 0.0
          %v225 = vrot.slane %v224, 4
          %v226 = vadd.f32 %v224, %v225
          %v227 = vrot.slane %v226, 2
          %v228 = vadd.f32 %v226, %v227
          %v229 = vrot.slane %v228, 1
          %v230 = vadd.f32 %v228, %v229
          %v231 = vsel %vm216, %v214, 0.0
          %v232 = vrot.slane %v231, 4
          %v233 = vadd.f32 %v231, %v232
          %v234 = vrot.slane %v233, 2
          %v235 = vadd.f32 %v233, %v234
          %v236 = vrot.slane %v235, 1
          %v237 = vadd.f32 %v235, %v236
          %v238 = vsel %vm216, %v215, 0.0
          %v239 = vrot.slane %v238, 4
          %v240 = vadd.f32 %v238, %v239
          %v241 = vrot.slane %v240, 2
          %v242 = vadd.f32 %v240, %v241
          %v243 = vrot.slane %v242, 1
          %v244 = vadd.f32 %v242, %v243
          %v249 = vcombine.low %v223, %v230
          %v250 = vcombine.low %v237, %v244
          %v252 = vunpack.c.l.s4 1966171168
          %v253 = vunpack.c.0.s8 %v252
          %v254 = vlaneseq
          %v255 = vshrl.u32 %v254, 7
          %v256 = vsub.s32 %v253, %v255
          %v257 = vrot.slane %v249, %v256
          %v259 = vunpack.c.l.s4 1966171168
          %v260 = vunpack.c.0.s8 %v259
          %v261 = vlaneseq
          %v262 = vshrl.u32 %v261, 7
          %v263 = vsub.s32 %v260, %v262
          %v264 = vrot.slane %v250, %v263
          %v265 = vcombine.low %v257, %v264
          %v267 = vunpack.c.l.s4 1966171168
          %v268 = vunpack.c.0.s8 %v267
          %v269 = vlaneseq
          %v270 = vshrl.u32 %v269, 7
          %v271 = vsub.s32 %v268, %v270
          %v272 = vrot.slane %v265, %v271
          %v274 = vadd.f32 %v202, %v272
          %v275 = vlaneseq
          %vm276 = vcmp.ge.s32.totalorder %v275, 0
          %vm277 = vcmp.lt.s32.totalorder %v275, 512
          %vm278 = vmand %vm276, %vm277
          %279 = vst.msk [vmem:[#allocation3] sm:$0xf] %vm278, %v274
          %280 = vst [vmem:[#allocation2] sm:$0xff] %v195
          %281 = vst [vmem:[#allocation2 + $0x8] sm:$0xff] %v196
          // Predicated region
          $region37: #{tpu_custom_call.1} parent=31 // pred_check
            %p282 = pneg %p186
          $region38: #{tpu_custom_call.1} parent=31 // pred_check_branch
            %284 = sbr.rel (%p282) target = $region40
          $region39: #{tpu_custom_call.1} parent=31 // pred_region
            %v285 = vld [vmem:[#allocation3] sm:$0xf]
            %v287 = vlaneseq
            %v288 = vshrl.u32 %v287, 7
            %v289 = vsub.s32 0, %v288
            %v290 = vrot.slane %v285, %v289
            %v291 = vlaneseq
            %v292 = vshrl.u32 %v291, 7
            %v293 = vsub.s32 1, %v292
            %v294 = vrot.slane %v285, %v293
            %v295 = vlaneseq
            %v296 = vshrl.u32 %v295, 7
            %v297 = vsub.s32 2, %v296
            %v298 = vrot.slane %v285, %v297
            %v299 = vlaneseq
            %v300 = vshrl.u32 %v299, 7
            %v301 = vsub.s32 3, %v300
            %v302 = vrot.slane %v285, %v301
            %vm307 = vcmask 1040384
            %v308 = vsel %vm307, %v290, 0.0
            %v309 = vsel %vm307, %v294, 0.0
            %v310 = vadd.f32 %v308, %v309
            %v311 = vsel %vm307, %v298, 0.0
            %v312 = vadd.f32 %v310, %v311
            %v313 = vsel %vm307, %v302, 0.0
            %v314 = vadd.f32 %v312, %v313
            %315 = vadd.xlane.f32.xlu0 %v314
            %v316 = vpop.xlane.xlu0 %315
            %v317 = vrot.slane %v316, 4
            %v318 = vadd.f32 %v316, %v317
            %v319 = vrot.slane %v318, 2
            %v320 = vadd.f32 %v318, %v319
            %v321 = vrot.slane %v320, 1
            %v322 = vadd.f32 %v320, %v321
            %s323 = vtos %v322
            %s324 = smul.f32 %s323, 0.00048828125
            %s325 = smul.f32 %s324, 2.0
            %s326 = smul.f32 %s325, 0.37796447
            %s327 = smax.f32 %s326, 1e-12
            %s328 = scalar_lea.smem [#allocation4], 0
            %329 = sst [smem:[%s328]] %s327
            %s330 = scalar_lea.smem [#allocation10], 0
            %331 = sst [smem:[%s330]] %s327
          $region40: #{tpu_custom_call.1} parent=31 // pred_fallthru
            _
        $region32: #{tpu_custom_call.1} parent=23 // pred_fallthru
          _
        %p332 = scmp.eq.s32.totalorder %s25, 1
        // Predicated region
        $region41: #{tpu_custom_call.1} parent=23 // pred_check
          %p333 = pneg %p332
        $region42: #{tpu_custom_call.1} parent=23 // pred_check_branch
          %335 = sbr.rel (%p333) target = $region44
        $region43: #{tpu_custom_call.1} parent=23 // pred_region
          %s336 = sld [smem:[#allocation4]]
          %v337 = vstv %s336
          %v338 = vrcp.pop %v337
          %s339 = vtos %v338
          %v340 = vld [vmem:[#allocation2] sm:$0xff]
          %v341 = vld [vmem:[#allocation2 + $0x8] sm:$0xff]
          %v342 = vstv %s339
          %v343 = vmul.f32 %v340, %v342
          %v344 = vmul.f32 %v341, %v342
          %v345 = vround.ne.pseudo %v343
          %v346 = vround.ne.pseudo %v344
          %v347 = vmax.f32 %v345, -4.0
          %v348 = vmax.f32 %v346, -4.0
          %v349 = vmin.f32 %v347, 3.0
          %v350 = vmin.f32 %v348, 3.0
          %v351 = vstv %s336
          %v352 = vmul.f32 %v349, %v351
          %v353 = vmul.f32 %v350, %v351
          %354 = vst [vmem:[%s176] sm:$0xff] %v352
          %355 = vst [vmem:[%s176 + $0x8] sm:$0xff] %v353
        $region44: #{tpu_custom_call.1} parent=23 // pred_fallthru
          _
        %s356 = sand.u32 %s73, 1
        %s357 = scalar_lea.sflag [#allocation7], %s356
        %s358 = sand.u32 %s73, 1
        %s359 = smul.addr %s358, 16
        %s360 = scalar_lea.vmem [#allocation9], %s359
        // Predicated region
        $region45: #{tpu_custom_call.1} parent=23 // pred_check
          %p361 = pneg %p83
        $region46: #{tpu_custom_call.1} parent=23 // pred_check_branch
          %363 = sbr.rel (%p361) target = $region48
        $region47: #{tpu_custom_call.1} parent=23 // pred_region
          %s364 = smul.u32 %s25, %s26
          %s366 = ssub.s32 256, 256
          %367 = vsyncadd %s357, %s366
          %s368 = smul.addr %s364, 4
          %s369 = smul.addr %s368, 64
          %s370 = scalar_lea.hbm %s1, %s369
          %s372 = sshll.u32 %s360, 4
          %s373 = int_to_ptr.vmem [resolvable:$true] %s372
          %375 = dma.vmem_to_hbm [thread:$0]  %s373, 256, %s370, %s357
        $region48: #{tpu_custom_call.1} parent=23 // pred_fallthru
          _
        // Predicated region
        $region49: #{tpu_custom_call.1} parent=23 // pred_check
          %p376 = pneg %p104
        $region50: #{tpu_custom_call.1} parent=23 // pred_check_branch
          %378 = sbr.rel (%p376) target = $region52
        $region51: #{tpu_custom_call.1} parent=23 // pred_region
          %s380 = ssub.s32 16, 16
          %381 = vsyncadd [#allocation8], %s380
          %384 = dma.smem_to_hbm [#allocation10], 16, %s2, [#allocation8]
        $region52: #{tpu_custom_call.1} parent=23 // pred_fallthru
          _
        // Predicated region
        $region53: #{tpu_custom_call.1} parent=23 // pred_check
          %p385 = pneg %p104
        $region54: #{tpu_custom_call.1} parent=23 // pred_check_branch
          %387 = sbr.rel (%p385) target = $region56
        $region55: #{tpu_custom_call.1} parent=23 // pred_region
          %388 = dma.done [#allocation8], 16
        $region56: #{tpu_custom_call.1} parent=23 // pred_fallthru
          _
        %389 = sfence
      $region24: #{tpu_custom_call.1} parent=5 // pred_fallthru
        _
      %p390 = scmp.le.s32.totalorder 2, %s16
      // Predicated region
      $region57: #{tpu_custom_call.1} parent=5 // pred_check
        %p391 = pneg %p390
      $region58: #{tpu_custom_call.1} parent=5 // pred_check_branch
        %393 = sbr.rel (%p391) target = $region60
      $region59: #{tpu_custom_call.1} parent=5 // pred_region
        %s394 = ssub.s32 %s16, 2
        // Predicated region
        $region61: #{tpu_custom_call.1} parent=59 // pred_check
          %p395 = pneg %p89
        $region62: #{tpu_custom_call.1} parent=59 // pred_check_branch
          %397 = sbr.rel (%p395) target = $region64
        $region63: #{tpu_custom_call.1} parent=59 // pred_region
          %s398 = sand.u32 %s74, 1
          %s399 = scalar_lea.sflag [#allocation7], %s398
          %s400 = sand.u32 %s74, 1
          %s401 = smul.addr %s400, 16
          %s402 = scalar_lea.vmem [#allocation9], %s401
          %403 = dma.done %s399, 256
        $region64: #{tpu_custom_call.1} parent=59 // pred_fallthru
          _
      $region60: #{tpu_custom_call.1} parent=5 // pred_fallthru
        _
    $region6: #{tpu_custom_call.1} parent=1 // loop_footer
      %s20 = sadd.s32 1, %s16
    $region7: #{tpu_custom_call.1} parent=1 // loop_footer_branch
      %15 = sbr.rel target = $region3
    $region8: #{tpu_custom_call.1} parent=1 // loop_exit
      _
    %404 = vsyncpa [#allocation6], 1
    %s405 = scalar_lea.sflag [#allocation6], 1
    %406 = vsyncpa %s405, 1
    %407 = vsyncpa [#allocation7], 1
    %s408 = scalar_lea.sflag [#allocation7], 1
    %409 = vsyncpa %s408, 1
    %410 = vsyncpa [#allocation8], 1
    %s411 = scalar_lea.sflag [#allocation8], 1
    %412 = vsyncpa %s411, 1

</llo_original>
